<compile_context>
chip_gen: v5e
topology: v5e:2x2
jax: 0.10.0
libtpu: 0.0.40
codegen_flags: <defaults>
</compile_context>

<pallas_src>
import jax
import jax.numpy as jnp
from jax.experimental import pallas as pl
from jax.experimental.pallas import tpu as pltpu


def _round_up(x, m):
    return (x + m - 1) // m * m


def _cdiv(a, b):
    return -(-a // b)


def _pad2(a, rows, cols):
    r, c = a.shape
    if r == rows and c == cols:
        return a
    return jnp.pad(a, ((0, rows - r), (0, cols - c)))


def mlp3_kernel(x_ref, w1_ref, b1_ref, w2_ref, b2_ref, w3_ref, b3_ref, o_ref):
    # Cast the streamed x tile on the VPU (avoids a separate host-side cast
    # pass: the kernel reads f32 once instead of f32->bf16 write + re-read).
    x = x_ref[...].astype(w1_ref.dtype)
    # Layer 1: x @ W1 + b1 -> ReLU   (bf16 MXU matmul, f32 accumulation)
    h = jnp.dot(x, w1_ref[...], preferred_element_type=jnp.float32)
    h = jnp.maximum(h + b1_ref[...], 0.0)
    # nn.Dropout: identity in inference mode.
    # TODO(synk): training-mode dropout would need pltpu.prng_seed +
    # pltpu.stateful_bernoulli masking here and after layer 2.
    # Layer 2: h @ W2 + b2 -> ReLU
    h = jnp.dot(h.astype(w2_ref.dtype), w2_ref[...],
                preferred_element_type=jnp.float32)
    h = jnp.maximum(h + b2_ref[...], 0.0)
    # Layer 3: h @ W3 + b3  (logits)
    h = jnp.dot(h.astype(w3_ref.dtype), w3_ref[...],
                preferred_element_type=jnp.float32)
    o_ref[...] = (h + b3_ref[...]).astype(o_ref.dtype)


def _vmem_capacity_bytes():
    """Per-core VMEM capacity; conservative fallback if the query fails."""
    try:
        cap = getattr(pltpu.get_tpu_info(), "vmem_capacity_bytes", None)
        if cap:
            return int(cap)
    except Exception:
        pass  # host-side query only; fall back to the smallest current gen
    return 64 * 1024 * 1024  # v7x per-TensorCore


def _pick_batch_tile(B, max_tb=512):
    """<= max_tb rows per tile, >= 2 grid steps when B >= 16 (v7x megacore),
    and tile size chosen so batch padding is < 8 rows per grid step."""
    n_steps = max(_cdiv(B, max_tb), 2 if B >= 16 else 1)
    return max(8, _round_up(_cdiv(B, n_steps), 8))


def mlp_forward(x, w1, b1, w2, b2, w3, b3, *, tb=None,
                compute_dtype=jnp.bfloat16, out_dtype=None):
    """x: (B, F); w_i: (in_i, out_i); b_i: (1, out_i). Returns (B, C)."""
    B, F = x.shape
    H, H2, C = w1.shape[1], w2.shape[1], w3.shape[1]
    assert w1.shape[0] == F and w2.shape[0] == H and w3.shape[0] == H2

    out_dtype = x.dtype if out_dtype is None else out_dtype

    # Lane-dense padded feature dims (multiples of 128 on the lane axis).
    Fp, Hp, H2p, Cp = (_round_up(d, 128) for d in (F, H, H2, C))

    if tb is None:
        tb = _pick_batch_tile(B)
    tb = max(8, _round_up(tb, 8))
    Bp = _round_up(B, tb)
    grid = (Bp // tb,)

    csize = jnp.dtype(compute_dtype).itemsize
    xsize = jnp.dtype(x.dtype).itemsize
    osize = jnp.dtype(out_dtype).itemsize

    # x stays in its input dtype (cast inside the kernel); padded only if the
    # shapes actually require it.
    xin = _pad2(x, Bp, Fp)
    w1p = _pad2(w1, Fp, Hp).astype(compute_dtype)
    w2p = _pad2(w2, Hp, H2p).astype(compute_dtype)
    w3p = _pad2(w3, H2p, Cp).astype(compute_dtype)
    b1p = _pad2(b1.astype(jnp.float32), 1, Hp)
    b2p = _pad2(b2.astype(jnp.float32), 1, H2p)
    b3p = _pad2(b3.astype(jnp.float32), 1, Cp)

    weight_bytes = (Fp * Hp + Hp * H2p + H2p * Cp) * csize
    bias_bytes = (Hp + H2p + Cp) * 4

    # Single-buffer the grid-constant weight blocks only when double-buffering
    # them would cost meaningful VMEM; small-weight models (like the demo) use
    # plain, maximally compatible BlockSpecs. No try/except compile fallback.
    single_buffer_weights = weight_bytes > (8 << 20)
    wbuf = 1 if single_buffer_weights else 2

    def wspec(shape):
        index_map = lambda i: (0,) * len(shape)
        if single_buffer_weights:
            return pl.BlockSpec(shape, index_map, pipeline_mode=pl.Buffered(1))
        return pl.BlockSpec(shape, index_map)

    # VMEM budget (no blanket 2x): double-buffered x/out tiles + resident
    # weights/biases (once per buffer used) + live activations including the
    # bf16 cast copies feeding the MXU.
    act_bytes = tb * (Fp * csize               # x cast to bf16
                      + Hp * (4 + csize)       # h1 f32 + bf16 copy
                      + H2p * (4 + csize)      # h2 f32 + bf16 copy
                      + Cp * 4)                # h3 f32
    need = (2 * tb * Fp * xsize                # pipelined x tile
            + 2 * tb * Cp * osize              # pipelined out tile
            + wbuf * (weight_bytes + bias_bytes)
            + act_bytes)
    cap = _vmem_capacity_bytes()
    vmem_limit = int(min(max(int(need * 1.25) + (2 << 20), 16 << 20),
                         int(cap * 0.85)))
    # TODO(synk): weight sets that do not fit resident in VMEM (first hit on
    # v7x's 64 MiB/TC; fp8 weights there would double the headroom) need a
    # K-tiled "arbitrary" grid axis with a pl.when-initialized f32 VMEM
    # accumulator instead of fully resident W1/W2/W3.

    flops = 2 * Bp * (Fp * Hp + Hp * H2p + H2p * Cp)
    bytes_accessed = int(xin.size * xsize + weight_bytes + bias_bytes
                         + Bp * Cp * osize)

    out = pl.pallas_call(
        mlp3_kernel,
        out_shape=jax.ShapeDtypeStruct((Bp, Cp), out_dtype),
        grid_spec=pltpu.PrefetchScalarGridSpec(
            num_scalar_prefetch=0,
            grid=grid,
            in_specs=[
                pl.BlockSpec((tb, Fp), lambda i: (i, 0)),   # x: tiled over batch
                wspec((Fp, Hp)), wspec((1, Hp)),            # W1, b1 (resident)
                wspec((Hp, H2p)), wspec((1, H2p)),          # W2, b2 (resident)
                wspec((H2p, Cp)), wspec((1, Cp)),           # W3, b3 (resident)
            ],
            out_specs=pl.BlockSpec((tb, Cp), lambda i: (i, 0)),
        ),
        compiler_params=pltpu.CompilerParams(
            dimension_semantics=("parallel",),
            vmem_limit_bytes=vmem_limit),
        cost_estimate=pl.CostEstimate(flops=flops, transcendentals=0,
                                      bytes_accessed=bytes_accessed),
    )(xin, w1p, b1p, w2p, b2p, w3p, b3p)

    return out[:B, :C]


def init_params(key, in_features, hidden_units, out_classes, dtype=jnp.float32):
    """Mimics nn.Linear's U(-1/sqrt(fan_in), +); weights stored transposed (in, out)."""
    h2 = hidden_units // 2
    keys = jax.random.split(key, 6)

    def layer(kw, kb, fan_in, fan_out):
        lim = 1.0 / (fan_in ** 0.5)
        w = jax.random.uniform(kw, (fan_in, fan_out), dtype, -lim, lim)
        b = jax.random.uniform(kb, (1, fan_out), dtype, -lim, lim)
        return w, b

    w1, b1 = layer(keys[0], keys[1], in_features, hidden_units)
    w2, b2 = layer(keys[2], keys[3], hidden_units, h2)
    w3, b3 = layer(keys[4], keys[5], h2, out_classes)
    return w1, b1, w2, b2, w3, b3


if __name__ == "__main__":
    batch, in_features, hidden_units, out_classes = 16, 32, 64, 16

    key = jax.random.PRNGKey(0)
    kx, kp = jax.random.split(key)
    x = jax.random.normal(kx, (batch, in_features), jnp.float32)
    w1, b1, w2, b2, w3, b3 = init_params(kp, in_features, hidden_units,
                                         out_classes)

    out = mlp_forward(x, w1, b1, w2, b2, w3, b3)
    out = jax.block_until_ready(out)

    # Pure-JAX reference using the same bf16-matmul / f32-accumulate recipe
    # (nn.Dropout is identity in inference mode).
    def bdot(a, w):
        return jnp.dot(a.astype(jnp.bfloat16), w.astype(jnp.bfloat16),
                       preferred_element_type=jnp.float32)

    h = jnp.maximum(bdot(x, w1) + b1, 0.0)
    h = jnp.maximum(bdot(h, w2) + b2, 0.0)
    ref = bdot(h, w3) + b3

    assert out.shape == (batch, out_classes)
    assert jnp.allclose(out, ref.astype(out.dtype), atol=2e-2, rtol=2e-2), (
        float(jnp.max(jnp.abs(out - ref))))
    print("KERNEL_OK")
</pallas_src>

<mosaic_0001>
module attributes {stable_mosaic.version = 11 : i64} {
  func.func @mlp3_kernel(%arg0: i32, %arg1: memref<8x128xf32, #tpu.memory_space<vmem>>, %arg2: memref<128x128xbf16, #tpu.memory_space<vmem>>, %arg3: memref<1x128xf32, #tpu.memory_space<vmem>>, %arg4: memref<128x128xbf16, #tpu.memory_space<vmem>>, %arg5: memref<1x128xf32, #tpu.memory_space<vmem>>, %arg6: memref<128x128xbf16, #tpu.memory_space<vmem>>, %arg7: memref<1x128xf32, #tpu.memory_space<vmem>>, %arg8: memref<8x128xf32, #tpu.memory_space<vmem>>) attributes {dimension_semantics = [#tpu.dimension_semantics<parallel>], iteration_bounds = array<i64: 2>, scalar_prefetch = 0 : i64, scratch_operands = 0 : i64, tpu.core_type = #tpu.core_type<tc>, window_params = [{transform_indices = @transform_0, window_bounds = array<i64: 8, 128>}, {pipeline_mode = #tpu.pipeline_mode<synchronous>, transform_indices = @transform_1, window_bounds = array<i64: 128, 128>}, {pipeline_mode = #tpu.pipeline_mode<synchronous>, transform_indices = @transform_2, window_bounds = array<i64: 1, 128>}, {pipeline_mode = #tpu.pipeline_mode<synchronous>, transform_indices = @transform_3, window_bounds = array<i64: 128, 128>}, {pipeline_mode = #tpu.pipeline_mode<synchronous>, transform_indices = @transform_4, window_bounds = array<i64: 1, 128>}, {pipeline_mode = #tpu.pipeline_mode<synchronous>, transform_indices = @transform_5, window_bounds = array<i64: 128, 128>}, {pipeline_mode = #tpu.pipeline_mode<synchronous>, transform_indices = @transform_6, window_bounds = array<i64: 1, 128>}, {transform_indices = @transform_7, window_bounds = array<i64: 8, 128>}]} {
    %c0 = arith.constant 0 : index
    %c0_0 = arith.constant 0 : index
    %0 = vector.load %arg1[%c0, %c0_0] : memref<8x128xf32, #tpu.memory_space<vmem>>, vector<8x128xf32>
    %1 = arith.truncf %0 : vector<8x128xf32> to vector<8x128xbf16>
    %c0_1 = arith.constant 0 : index
    %c0_2 = arith.constant 0 : index
    %2 = vector.load %arg2[%c0_1, %c0_2] : memref<128x128xbf16, #tpu.memory_space<vmem>>, vector<128x128xbf16>
    %cst = arith.constant dense<0.000000e+00> : vector<8x128xf32>
    %3 = tpu.matmul %1, %2, %cst {dimension_numbers = #tpu.dot_dimension_numbers<[1], [0], [0], [1], [0, 0, 1, 1], [], []>} : vector<8x128xbf16>, vector<128x128xbf16>, vector<8x128xf32> -> vector<8x128xf32>
    %c0_3 = arith.constant 0 : index
    %c0_4 = arith.constant 0 : index
    %4 = vector.load %arg3[%c0_3, %c0_4] : memref<1x128xf32, #tpu.memory_space<vmem>>, vector<1x128xf32>
    %5 = vector.broadcast %4 : vector<1x128xf32> to vector<8x128xf32>
    %6 = arith.addf %3, %5 : vector<8x128xf32>
    %cst_5 = arith.constant 0.000000e+00 : f32
    %7 = vector.broadcast %cst_5 : f32 to vector<8x128xf32>
    %8 = arith.maximumf %6, %7 : vector<8x128xf32>
    %9 = arith.truncf %8 : vector<8x128xf32> to vector<8x128xbf16>
    %c0_6 = arith.constant 0 : index
    %c0_7 = arith.constant 0 : index
    %10 = vector.load %arg4[%c0_6, %c0_7] : memref<128x128xbf16, #tpu.memory_space<vmem>>, vector<128x128xbf16>
    %cst_8 = arith.constant dense<0.000000e+00> : vector<8x128xf32>
    %11 = tpu.matmul %9, %10, %cst_8 {dimension_numbers = #tpu.dot_dimension_numbers<[1], [0], [0], [1], [0, 0, 1, 1], [], []>} : vector<8x128xbf16>, vector<128x128xbf16>, vector<8x128xf32> -> vector<8x128xf32>
    %c0_9 = arith.constant 0 : index
    %c0_10 = arith.constant 0 : index
    %12 = vector.load %arg5[%c0_9, %c0_10] : memref<1x128xf32, #tpu.memory_space<vmem>>, vector<1x128xf32>
    %13 = vector.broadcast %12 : vector<1x128xf32> to vector<8x128xf32>
    %14 = arith.addf %11, %13 : vector<8x128xf32>
    %cst_11 = arith.constant 0.000000e+00 : f32
    %15 = vector.broadcast %cst_11 : f32 to vector<8x128xf32>
    %16 = arith.maximumf %14, %15 : vector<8x128xf32>
    %17 = arith.truncf %16 : vector<8x128xf32> to vector<8x128xbf16>
    %c0_12 = arith.constant 0 : index
    %c0_13 = arith.constant 0 : index
    %18 = vector.load %arg6[%c0_12, %c0_13] : memref<128x128xbf16, #tpu.memory_space<vmem>>, vector<128x128xbf16>
    %cst_14 = arith.constant dense<0.000000e+00> : vector<8x128xf32>
    %19 = tpu.matmul %17, %18, %cst_14 {dimension_numbers = #tpu.dot_dimension_numbers<[1], [0], [0], [1], [0, 0, 1, 1], [], []>} : vector<8x128xbf16>, vector<128x128xbf16>, vector<8x128xf32> -> vector<8x128xf32>
    %c0_15 = arith.constant 0 : index
    %c0_16 = arith.constant 0 : index
    %20 = vector.load %arg7[%c0_15, %c0_16] : memref<1x128xf32, #tpu.memory_space<vmem>>, vector<1x128xf32>
    %21 = vector.broadcast %20 : vector<1x128xf32> to vector<8x128xf32>
    %22 = arith.addf %19, %21 : vector<8x128xf32>
    %c0_17 = arith.constant 0 : index
    %c0_18 = arith.constant 0 : index
    %23 = vector.load %arg8[%c0_17, %c0_18] : memref<8x128xf32, #tpu.memory_space<vmem>>, vector<8x128xf32>
    tpu.vector_store %arg8[%c0_17, %c0_18], %22 {strides = array<i32>} : memref<8x128xf32, #tpu.memory_space<vmem>>, vector<8x128xf32>,
    return
  }
  func.func @transform_0(%arg0: i32) -> (i32, i32) {
    %c0_i32 = arith.constant 0 : i32
    %c0_i32_0 = arith.constant 0 : i32
    return %arg0, %c0_i32 : i32, i32
  }
  func.func @transform_1(%arg0: i32) -> (i32, i32) {
    %c0_i32 = arith.constant 0 : i32
    %c0_i32_0 = arith.constant 0 : i32
    %c0_i32_1 = arith.constant 0 : i32
    return %c0_i32, %c0_i32_0 : i32, i32
  }
  func.func @transform_2(%arg0: i32) -> (i32, i32) {
    %c0_i32 = arith.constant 0 : i32
    %c0_i32_0 = arith.constant 0 : i32
    %c0_i32_1 = arith.constant 0 : i32
    return %c0_i32, %c0_i32_0 : i32, i32
  }
  func.func @transform_3(%arg0: i32) -> (i32, i32) {
    %c0_i32 = arith.constant 0 : i32
    %c0_i32_0 = arith.constant 0 : i32
    %c0_i32_1 = arith.constant 0 : i32
    return %c0_i32, %c0_i32_0 : i32, i32
  }
  func.func @transform_4(%arg0: i32) -> (i32, i32) {
    %c0_i32 = arith.constant 0 : i32
    %c0_i32_0 = arith.constant 0 : i32
    %c0_i32_1 = arith.constant 0 : i32
    return %c0_i32, %c0_i32_0 : i32, i32
  }
  func.func @transform_5(%arg0: i32) -> (i32, i32) {
    %c0_i32 = arith.constant 0 : i32
    %c0_i32_0 = arith.constant 0 : i32
    %c0_i32_1 = arith.constant 0 : i32
    return %c0_i32, %c0_i32_0 : i32, i32
  }
  func.func @transform_6(%arg0: i32) -> (i32, i32) {
    %c0_i32 = arith.constant 0 : i32
    %c0_i32_0 = arith.constant 0 : i32
    %c0_i32_1 = arith.constant 0 : i32
    return %c0_i32, %c0_i32_0 : i32, i32
  }
  func.func @transform_7(%arg0: i32) -> (i32, i32) {
    %c0_i32 = arith.constant 0 : i32
    %c0_i32_0 = arith.constant 0 : i32
    return %arg0, %c0_i32 : i32, i32
  }
}

</mosaic_0001>

<llo_original>
// kernel: tpu_custom_call.1
$region0: #{tpu_custom_call.1}
  #allocation0 [shape = 'u32[]', space=smem, size = 0x4, offset = 0x4, fixed_abs, tag = 'smem constant byte address 0x4 - core index']
  #allocation1 [shape = 'u32[72,128]{1,0:T(1,128)}', space=vmem, size = 0x9000, scoped, tag = 'internal scratch']
  %s0 = inlined_call_operand.hbm [shape: f32[16,128], index: 0, kind: input, shape index: {}]
  %s1 = inlined_call_operand.hbm [shape: bf16[128,128], index: 1, kind: input, shape index: {}]
  %s2 = inlined_call_operand.vmem [shape: f32[1,128], index: 2, kind: input, shape index: {}]
  %s3 = inlined_call_operand.hbm [shape: bf16[128,128], index: 3, kind: input, shape index: {}]
  %s4 = inlined_call_operand.vmem [shape: f32[1,128], index: 4, kind: input, shape index: {}]
  %s5 = inlined_call_operand.hbm [shape: bf16[128,128], index: 5, kind: input, shape index: {}]
  %s6 = inlined_call_operand.vmem [shape: f32[1,128], index: 6, kind: input, shape index: {}]
  %s7 = inlined_call_operand.hbm [shape: f32[16,128], index: 7, kind: output, shape index: {}]
  %s8 = sld [smem:[#allocation0]]
  $region77: #{tpu_custom_call.1} parent=0
    _
  %s10 = ssub.s32 1, %s8
  %s11 = scalar_select 0, %s10, %s8
  $region1: #{tpu_custom_call.1} parent=0
    #allocation2 [shape = 'u8[8192]{0}', space=vmem, size = 0x2000, scoped, tag = 'input window, operand 0']
    #allocation3 [shape = 's32[2]{0}', space=sflag, size = 0x8, scoped, tag = 'scoped memory for tpu_custom_call.1']
    #allocation4 [shape = 's32[2]{0}', space=sflag, size = 0x8, scoped, tag = 'scoped memory for tpu_custom_call.1']
    #allocation5 [shape = 'u8[32768]{0}', space=vmem, size = 0x8000, scoped, tag = 'input window, operand 1, single buffered']
    #allocation6 [shape = 's32[1]{0}', space=sflag, size = 0x4, scoped, tag = 'scoped memory for tpu_custom_call.1']
    #allocation7 [shape = 'u8[32768]{0}', space=vmem, size = 0x8000, scoped, tag = 'input window, operand 3, single buffered']
    #allocation8 [shape = 'u8[32768]{0}', space=vmem, size = 0x8000, scoped, tag = 'input window, operand 5, single buffered']
    #allocation9 [shape = 's32[1]{0}', space=sflag, size = 0x4, scoped, tag = 'scoped memory for tpu_custom_call.1']
    #allocation10 [shape = 'u8[8192]{0}', space=vmem, size = 0x2000, scoped, tag = 'output window, operand 0']
    %12 = vsyncpa [#allocation3], 0
    %s13 = scalar_lea.sflag [#allocation3], 1
    %14 = vsyncpa %s13, 0
    %15 = vsyncpa [#allocation6], 0
    %16 = vsyncpa [#allocation9], 0
    %17 = vsyncpa [#allocation4], 0
    %s18 = scalar_lea.sflag [#allocation4], 1
    %19 = vsyncpa %s18, 0
    loop: start=0, step=1, limit=4
    $region2: #{tpu_custom_call.1} parent=1 // loop_pre_header
      _
    $region3: #{tpu_custom_call.1} parent=1 // loop_header
      %s21 = sphi 0, %s25
      %p22 = scmp.ge.s32.totalorder %s21, 4
      %s31 = sphi 0, %s33
      %s34 = sphi 0, %s31
      %s35 = sphi 0, %s34
      %s51 = sphi 0, %s35
      %s55 = sphi 0, %s55
      %s57 = sphi 0, %s55
      %s58 = sphi 0, %s57
      %s72 = sphi 0, %s58
      %s76 = sphi 0, %s76
      %s78 = sphi 0, %s76
      %s79 = sphi 0, %s78
      %s93 = sphi 0, %s79
      %s97 = sphi 0, %s97
      %s99 = sphi 0, %s97
      %s100 = sphi 0, %s99
      %s114 = sphi 0, %s100
      %s118 = sphi 0, %s118
      %s120 = sphi 0, %s118
      %s121 = sphi 0, %s120
      %s135 = sphi 0, %s121
      %s139 = sphi 0, %s139
      %s141 = sphi 0, %s139
      %s142 = sphi 0, %s141
      %s156 = sphi 0, %s142
      %s160 = sphi 0, %s160
      %s162 = sphi 0, %s160
      %s163 = sphi 0, %s162
      %s177 = sphi 0, %s163
      %s183 = sphi 0, %s185
      %s186 = sphi 0, %s183
      %s187 = sphi 0, %s186
      %s203 = sphi 0, %s187
    $region4: #{tpu_custom_call.1} parent=1 // loop_header_branch
      %24 = sbr.rel (%p22) target = $region8
    $region5: #{tpu_custom_call.1} parent=1 // loop_body
      %s26 = ssub.s32 %s21, 1
      %s27 = ssub.s32 %s21, 2
      %s28 = sadd.s32 %s21, 1
      %s29 = ssub.s32 %s21, %s28
      %p30 = scmp.eq.s32.totalorder %s29, 0
      %s32 = sadd.s32 %s31, 1
      %s33 = scalar_select %p30, %s31, %s32
      %p36 = pneg %p30
      %p37 = scmp.eq.s32.totalorder %s21, 1
      %p38 = por %p36, %p37
      %p39 = scmp.ne.s32.totalorder %s31, %s34
      %p40 = scmp.eq.s32.totalorder %s21, 0
      %p41 = por %p39, %p40
      %p42 = scmp.ne.s32.totalorder %s31, %s34
      %p43 = scmp.eq.s32.totalorder %s26, 1
      %p44 = por %p42, %p43
      %p45 = scmp.ne.s32.totalorder %s34, %s35
      %p46 = scmp.eq.s32.totalorder %s26, 0
      %p47 = por %p45, %p46
      %p48 = scmp.ne.s32.totalorder %s34, %s35
      %p49 = scmp.eq.s32.totalorder %s27, 1
      %p50 = por %p48, %p49
      %p52 = scmp.ne.s32.totalorder %s35, %s51
      %p53 = scmp.eq.s32.totalorder %s27, 0
      %p54 = por %p52, %p53
      %s56 = sadd.s32 %s55, 1
      %p59 = scmp.eq.s32.totalorder %s21, 1
      %p60 = scmp.ne.s32.totalorder %s55, %s57
      %p61 = scmp.eq.s32.totalorder %s21, 0
      %p62 = por %p60, %p61
      %p63 = scmp.ne.s32.totalorder %s55, %s57
      %p64 = scmp.eq.s32.totalorder %s26, 1
      %p65 = por %p63, %p64
      %p66 = scmp.ne.s32.totalorder %s57, %s58
      %p67 = scmp.eq.s32.totalorder %s26, 0
      %p68 = por %p66, %p67
      %p69 = scmp.ne.s32.totalorder %s57, %s58
      %p70 = scmp.eq.s32.totalorder %s27, 1
      %p71 = por %p69, %p70
      %p73 = scmp.ne.s32.totalorder %s58, %s72
      %p74 = scmp.eq.s32.totalorder %s27, 0
      %p75 = por %p73, %p74
      %s77 = sadd.s32 %s76, 1
      %p80 = scmp.eq.s32.totalorder %s21, 1
      %p81 = scmp.ne.s32.totalorder %s76, %s78
      %p82 = scmp.eq.s32.totalorder %s21, 0
      %p83 = por %p81, %p82
      %p84 = scmp.ne.s32.totalorder %s76, %s78
      %p85 = scmp.eq.s32.totalorder %s26, 1
      %p86 = por %p84, %p85
      %p87 = scmp.ne.s32.totalorder %s78, %s79
      %p88 = scmp.eq.s32.totalorder %s26, 0
      %p89 = por %p87, %p88
      %p90 = scmp.ne.s32.totalorder %s78, %s79
      %p91 = scmp.eq.s32.totalorder %s27, 1
      %p92 = por %p90, %p91
      %p94 = scmp.ne.s32.totalorder %s79, %s93
      %p95 = scmp.eq.s32.totalorder %s27, 0
      %p96 = por %p94, %p95
      %s98 = sadd.s32 %s97, 1
      %p101 = scmp.eq.s32.totalorder %s21, 1
      %p102 = scmp.ne.s32.totalorder %s97, %s99
      %p103 = scmp.eq.s32.totalorder %s21, 0
      %p104 = por %p102, %p103
      %p105 = scmp.ne.s32.totalorder %s97, %s99
      %p106 = scmp.eq.s32.totalorder %s26, 1
      %p107 = por %p105, %p106
      %p108 = scmp.ne.s32.totalorder %s99, %s100
      %p109 = scmp.eq.s32.totalorder %s26, 0
      %p110 = por %p108, %p109
      %p111 = scmp.ne.s32.totalorder %s99, %s100
      %p112 = scmp.eq.s32.totalorder %s27, 1
      %p113 = por %p111, %p112
      %p115 = scmp.ne.s32.totalorder %s100, %s114
      %p116 = scmp.eq.s32.totalorder %s27, 0
      %p117 = por %p115, %p116
      %s119 = sadd.s32 %s118, 1
      %p122 = scmp.eq.s32.totalorder %s21, 1
      %p123 = scmp.ne.s32.totalorder %s118, %s120
      %p124 = scmp.eq.s32.totalorder %s21, 0
      %p125 = por %p123, %p124
      %p126 = scmp.ne.s32.totalorder %s118, %s120
      %p127 = scmp.eq.s32.totalorder %s26, 1
      %p128 = por %p126, %p127
      %p129 = scmp.ne.s32.totalorder %s120, %s121
      %p130 = scmp.eq.s32.totalorder %s26, 0
      %p131 = por %p129, %p130
      %p132 = scmp.ne.s32.totalorder %s120, %s121
      %p133 = scmp.eq.s32.totalorder %s27, 1
      %p134 = por %p132, %p133
      %p136 = scmp.ne.s32.totalorder %s121, %s135
      %p137 = scmp.eq.s32.totalorder %s27, 0
      %p138 = por %p136, %p137
      %s140 = sadd.s32 %s139, 1
      %p143 = scmp.eq.s32.totalorder %s21, 1
      %p144 = scmp.ne.s32.totalorder %s139, %s141
      %p145 = scmp.eq.s32.totalorder %s21, 0
      %p146 = por %p144, %p145
      %p147 = scmp.ne.s32.totalorder %s139, %s141
      %p148 = scmp.eq.s32.totalorder %s26, 1
      %p149 = por %p147, %p148
      %p150 = scmp.ne.s32.totalorder %s141, %s142
      %p151 = scmp.eq.s32.totalorder %s26, 0
      %p152 = por %p150, %p151
      %p153 = scmp.ne.s32.totalorder %s141, %s142
      %p154 = scmp.eq.s32.totalorder %s27, 1
      %p155 = por %p153, %p154
      %p157 = scmp.ne.s32.totalorder %s142, %s156
      %p158 = scmp.eq.s32.totalorder %s27, 0
      %p159 = por %p157, %p158
      %s161 = sadd.s32 %s160, 1
      %p164 = scmp.eq.s32.totalorder %s21, 1
      %p165 = scmp.ne.s32.totalorder %s160, %s162
      %p166 = scmp.eq.s32.totalorder %s21, 0
      %p167 = por %p165, %p166
      %p168 = scmp.ne.s32.totalorder %s160, %s162
      %p169 = scmp.eq.s32.totalorder %s26, 1
      %p170 = por %p168, %p169
      %p171 = scmp.ne.s32.totalorder %s162, %s163
      %p172 = scmp.eq.s32.totalorder %s26, 0
      %p173 = por %p171, %p172
      %p174 = scmp.ne.s32.totalorder %s162, %s163
      %p175 = scmp.eq.s32.totalorder %s27, 1
      %p176 = por %p174, %p175
      %p178 = scmp.ne.s32.totalorder %s163, %s177
      %p179 = scmp.eq.s32.totalorder %s27, 0
      %p180 = por %p178, %p179
      %s181 = ssub.s32 %s21, %s28
      %p182 = scmp.eq.s32.totalorder %s181, 0
      %s184 = sadd.s32 %s183, 1
      %s185 = scalar_select %p182, %s183, %s184
      %p188 = pneg %p182
      %p189 = scmp.eq.s32.totalorder %s21, 1
      %p190 = por %p188, %p189
      %p191 = scmp.ne.s32.totalorder %s183, %s186
      %p192 = scmp.eq.s32.totalorder %s21, 0
      %p193 = por %p191, %p192
      %p194 = scmp.ne.s32.totalorder %s183, %s186
      %p195 = scmp.eq.s32.totalorder %s26, 1
      %p196 = por %p194, %p195
      %p197 = scmp.ne.s32.totalorder %s186, %s187
      %p198 = scmp.eq.s32.totalorder %s26, 0
      %p199 = por %p197, %p198
      %p200 = scmp.ne.s32.totalorder %s186, %s187
      %p201 = scmp.eq.s32.totalorder %s27, 1
      %p202 = por %p200, %p201
      %p204 = scmp.ne.s32.totalorder %s187, %s203
      %p205 = scmp.eq.s32.totalorder %s27, 0
      %p206 = por %p204, %p205
      %p207 = scmp.le.s32.totalorder 1, %s21
      %p208 = scmp.lt.s32.totalorder %s21, 3
      %p209 = pnand %p207, %p208
      %p210 = pneg %p209
      // Predicated region
      $region9: #{tpu_custom_call.1} parent=5 // pred_check
        _
      $region10: #{tpu_custom_call.1} parent=5 // pred_check_branch
        %212 = sbr.rel (%p209) target = $region12
      $region11: #{tpu_custom_call.1} parent=5 // pred_region
        %s213 = ssub.s32 %s21, 1
        // Predicated region
        $region13: #{tpu_custom_call.1} parent=11 // pred_check
          %p214 = pneg %p68
        $region14: #{tpu_custom_call.1} parent=11 // pred_check_branch
          %216 = sbr.rel (%p214) target = $region16
        $region15: #{tpu_custom_call.1} parent=11 // pred_region
          %218 = vsyncadd [#allocation6], 0
          %s219 = sshll.u32 %s1, 4
          %s220 = int_to_ptr.hbm [resolvable:$true] %s219
          %s221 = sshll.u32 [#allocation5], 4
          %s222 = int_to_ptr.vmem [resolvable:$true] %s221
          %227 = dma.hbm_to_vmem [thread:$0]  %s220, 1024, %s222, [#allocation6], 64, 64, 4
        $region16: #{tpu_custom_call.1} parent=11 // pred_fallthru
          _
        // Predicated region
        $region17: #{tpu_custom_call.1} parent=11 // pred_check
          %p228 = pneg %p89
        $region18: #{tpu_custom_call.1} parent=11 // pred_check_branch
          %230 = sbr.rel (%p228) target = $region20
        $region19: #{tpu_custom_call.1} parent=11 // pred_region
          _
        $region20: #{tpu_custom_call.1} parent=11 // pred_fallthru
          _
        // Predicated region
        $region21: #{tpu_custom_call.1} parent=11 // pred_check
          %p231 = pneg %p110
        $region22: #{tpu_custom_call.1} parent=11 // pred_check_branch
          %233 = sbr.rel (%p231) target = $region24
        $region23: #{tpu_custom_call.1} parent=11 // pred_region
          %235 = vsyncadd [#allocation6], 0
          %s236 = sshll.u32 %s3, 4
          %s237 = int_to_ptr.hbm [resolvable:$true] %s236
          %s238 = sshll.u32 [#allocation7], 4
          %s239 = int_to_ptr.vmem [resolvable:$true] %s238
          %244 = dma.hbm_to_vmem [thread:$0]  %s237, 1024, %s239, [#allocation6], 64, 64, 4
        $region24: #{tpu_custom_call.1} parent=11 // pred_fallthru
          _
        // Predicated region
        $region25: #{tpu_custom_call.1} parent=11 // pred_check
          %p245 = pneg %p131
        $region26: #{tpu_custom_call.1} parent=11 // pred_check_branch
          %247 = sbr.rel (%p245) target = $region28
        $region27: #{tpu_custom_call.1} parent=11 // pred_region
          _
        $region28: #{tpu_custom_call.1} parent=11 // pred_fallthru
          _
        // Predicated region
        $region29: #{tpu_custom_call.1} parent=11 // pred_check
          %p248 = pneg %p152
        $region30: #{tpu_custom_call.1} parent=11 // pred_check_branch
          %250 = sbr.rel (%p248) target = $region32
        $region31: #{tpu_custom_call.1} parent=11 // pred_region
          %252 = vsyncadd [#allocation9], 0
          %s253 = sshll.u32 %s5, 4
          %s254 = int_to_ptr.hbm [resolvable:$true] %s253
          %s255 = sshll.u32 [#allocation8], 4
          %s256 = int_to_ptr.vmem [resolvable:$true] %s255
          %261 = dma.hbm_to_vmem [thread:$0]  %s254, 1024, %s256, [#allocation9], 64, 64, 4
        $region32: #{tpu_custom_call.1} parent=11 // pred_fallthru
          _
        // Predicated region
        $region33: #{tpu_custom_call.1} parent=11 // pred_check
          %p262 = pneg %p173
        $region34: #{tpu_custom_call.1} parent=11 // pred_check_branch
          %264 = sbr.rel (%p262) target = $region36
        $region35: #{tpu_custom_call.1} parent=11 // pred_region
          _
        $region36: #{tpu_custom_call.1} parent=11 // pred_fallthru
          _
      $region12: #{tpu_custom_call.1} parent=5 // pred_fallthru
        _
      %p265 = scmp.lt.s32.totalorder %s21, 2
      // Predicated region
      $region37: #{tpu_custom_call.1} parent=5 // pred_check
        %p266 = pneg %p265
      $region38: #{tpu_custom_call.1} parent=5 // pred_check_branch
        %268 = sbr.rel (%p266) target = $region40
      $region39: #{tpu_custom_call.1} parent=5 // pred_region
        // Predicated region
        $region41: #{tpu_custom_call.1} parent=39 // pred_check
          %p269 = pneg %p41
        $region42: #{tpu_custom_call.1} parent=39 // pred_check_branch
          %271 = sbr.rel (%p269) target = $region44
        $region43: #{tpu_custom_call.1} parent=39 // pred_region
          %s272 = sand.u32 %s31, 1
          %s273 = scalar_lea.sflag [#allocation3], %s272
          %s274 = sand.u32 %s31, 1
          %s275 = smul.addr %s274, 8
          %s276 = scalar_lea.vmem [#allocation2], %s275
          %278 = vsyncadd %s273, 0
          %s279 = smul.addr %s21, 8
          %s280 = scalar_lea.hbm %s0, %s279
          %s282 = sshll.u32 %s280, 4
          %s283 = int_to_ptr.hbm [resolvable:$true] %s282
          %s284 = sshll.u32 %s276, 4
          %s285 = int_to_ptr.vmem [resolvable:$true] %s284
          %287 = dma.hbm_to_vmem [thread:$0]  %s283, 128, %s285, %s273
        $region44: #{tpu_custom_call.1} parent=39 // pred_fallthru
          _
      $region40: #{tpu_custom_call.1} parent=5 // pred_fallthru
        _
      %p288 = scmp.le.s32.totalorder 1, %s21
      %p289 = scmp.lt.s32.totalorder %s21, 3
      %p290 = pnand %p288, %p289
      %p291 = pneg %p290
      // Predicated region
      $region45: #{tpu_custom_call.1} parent=5 // pred_check
        _
      $region46: #{tpu_custom_call.1} parent=5 // pred_check_branch
        %293 = sbr.rel (%p290) target = $region48
      $region47: #{tpu_custom_call.1} parent=5 // pred_region
        %s294 = ssub.s32 %s21, 1
        %s295 = sand.u32 %s34, 1
        %s296 = scalar_lea.sflag [#allocation3], %s295
        %s297 = sand.u32 %s34, 1
        %s298 = smul.addr %s297, 8
        %s299 = scalar_lea.vmem [#allocation2], %s298
        // Predicated region
        $region49: #{tpu_custom_call.1} parent=47 // pred_check
          %p300 = pneg %p47
        $region50: #{tpu_custom_call.1} parent=47 // pred_check_branch
          %302 = sbr.rel (%p300) target = $region52
        $region51: #{tpu_custom_call.1} parent=47 // pred_region
          %304 = dma.done %s296, 128
        $region52: #{tpu_custom_call.1} parent=47 // pred_fallthru
          _
        // Predicated region
        $region53: #{tpu_custom_call.1} parent=47 // pred_check
          %p305 = pneg %p68
        $region54: #{tpu_custom_call.1} parent=47 // pred_check_branch
          %307 = sbr.rel (%p305) target = $region56
        $region55: #{tpu_custom_call.1} parent=47 // pred_region
          %309 = dma.done [#allocation6], 1024
        $region56: #{tpu_custom_call.1} parent=47 // pred_fallthru
          _
        // Predicated region
        $region57: #{tpu_custom_call.1} parent=47 // pred_check
          %p310 = pneg %p110
        $region58: #{tpu_custom_call.1} parent=47 // pred_check_branch
          %312 = sbr.rel (%p310) target = $region60
        $region59: #{tpu_custom_call.1} parent=47 // pred_region
          %314 = dma.done [#allocation6], 1024
        $region60: #{tpu_custom_call.1} parent=47 // pred_fallthru
          _
        // Predicated region
        $region61: #{tpu_custom_call.1} parent=47 // pred_check
          %p315 = pneg %p152
        $region62: #{tpu_custom_call.1} parent=47 // pred_check_branch
          %317 = sbr.rel (%p315) target = $region64
        $region63: #{tpu_custom_call.1} parent=47 // pred_region
          %319 = dma.done [#allocation9], 1024
        $region64: #{tpu_custom_call.1} parent=47 // pred_fallthru
          _
        %s320 = sand.u32 %s34, 1
        %s321 = scalar_lea.sflag [#allocation3], %s320
        %s322 = sand.u32 %s34, 1
        %s323 = smul.addr %s322, 8
        %s324 = scalar_lea.vmem [#allocation2], %s323
        %p325 = pneg %p47
        %p326 = pneg %p44
        %p327 = pneg %p68
        %p328 = pneg %p65
        %p329 = pneg %p89
        %p330 = pneg %p86
        %p331 = pneg %p110
        %p332 = pneg %p107
        %p333 = pneg %p131
        %p334 = pneg %p128
        %p335 = pneg %p152
        %p336 = pneg %p149
        %p337 = pneg %p173
        %p338 = pneg %p170
        %p339 = pneg %p199
        %p340 = pneg %p196
        %s341 = sand.u32 %s186, 1
        %s342 = scalar_lea.sflag [#allocation4], %s341
        %s343 = sand.u32 %s186, 1
        %s344 = smul.addr %s343, 8
        %s345 = scalar_lea.vmem [#allocation10], %s344
        %v346 = vld [vmem:[%s299] sm:$0xff]
        %v347 = vpack.c.bf16 %v346, %v346
        %v348 = vld [vmem:[#allocation5] sm:$0xf]
        %v349 = vld [vmem:[#allocation5 + $0x4] sm:$0xf]
        %v350 = vld [vmem:[#allocation5 + $0x8] sm:$0xf]
        %v351 = vld [vmem:[#allocation5 + $0xc] sm:$0xf]
        %v352 = vld [vmem:[#allocation5 + $0x10] sm:$0xf]
        %v353 = vld [vmem:[#allocation5 + $0x14] sm:$0xf]
        %v354 = vld [vmem:[#allocation5 + $0x18] sm:$0xf]
        %v355 = vld [vmem:[#allocation5 + $0x1c] sm:$0xf]
        %v356 = vld [vmem:[#allocation5 + $0x20] sm:$0xf]
        %v357 = vld [vmem:[#allocation5 + $0x24] sm:$0xf]
        %v358 = vld [vmem:[#allocation5 + $0x28] sm:$0xf]
        %v359 = vld [vmem:[#allocation5 + $0x2c] sm:$0xf]
        %v360 = vld [vmem:[#allocation5 + $0x30] sm:$0xf]
        %v361 = vld [vmem:[#allocation5 + $0x34] sm:$0xf]
        %v362 = vld [vmem:[#allocation5 + $0x38] sm:$0xf]
        %v363 = vld [vmem:[#allocation5 + $0x3c] sm:$0xf]
        %v364 = vld [vmem:[%s2] sm:$0x1]
        %v366 = vperm.slane %v364, 0
        %v384 = vunpack.c.l.b16 %v348
        %v385 = vunpack.c.l.b16 %v349
        %v386 = vunpack.c.l.b16 %v350
        %v387 = vunpack.c.l.b16 %v351
        %v388 = vunpack.c.l.b16 %v352
        %v389 = vunpack.c.l.b16 %v353
        %v390 = vunpack.c.l.b16 %v354
        %v391 = vunpack.c.l.b16 %v355
        %v392 = vunpack.c.l.b16 %v356
        %v393 = vunpack.c.l.b16 %v357
        %v394 = vunpack.c.l.b16 %v358
        %v395 = vunpack.c.l.b16 %v359
        %v396 = vunpack.c.l.b16 %v360
        %v397 = vunpack.c.l.b16 %v361
        %v398 = vunpack.c.l.b16 %v362
        %v399 = vunpack.c.l.b16 %v363
        %v400 = vpack.c.b16 %v385, %v384
        %v401 = vpack.c.b16 %v387, %v386
        %v402 = vpack.c.b16 %v389, %v388
        %v403 = vpack.c.b16 %v391, %v390
        %v404 = vpack.c.b16 %v393, %v392
        %v405 = vpack.c.b16 %v395, %v394
        %v406 = vpack.c.b16 %v397, %v396
        %v407 = vpack.c.b16 %v399, %v398
        %416 = vmatpush.bf16.msra.mxu0 %v407
        %417 = vmatpush.bf16.msra.mxu0 %v406
        %418 = vmatpush.bf16.msra.mxu0 %v405
        %419 = vmatpush.bf16.msra.mxu0 %v404
        %420 = vmatpush.bf16.msra.mxu0 %v403
        %421 = vmatpush.bf16.msra.mxu0 %v402
        %422 = vmatpush.bf16.msra.mxu0 %v401
        %423 = vmatpush.bf16.msra.mxu0 %v400
        %424 = vmatmul.bf16.gmra.mxu0 %v347
        %v425 = vpop.f32.mrf.mxu0
        %v426 = vadd.f32 %v366, %v425
        %v427 = vpop.f32.mrf.mxu0
        %428 = vdwg.mxu0
        %v429 = vmax.f32 %v426, 0.0
        %v430 = vpack.c.bf16 %v429, %v429
        %v431 = vld [vmem:[#allocation7] sm:$0xf]
        %v432 = vld [vmem:[#allocation7 + $0x4] sm:$0xf]
        %v433 = vld [vmem:[#allocation7 + $0x8] sm:$0xf]
        %v434 = vld [vmem:[#allocation7 + $0xc] sm:$0xf]
        %v435 = vld [vmem:[#allocation7 + $0x10] sm:$0xf]
        %v436 = vld [vmem:[#allocation7 + $0x14] sm:$0xf]
        %v437 = vld [vmem:[#allocation7 + $0x18] sm:$0xf]
        %v438 = vld [vmem:[#allocation7 + $0x1c] sm:$0xf]
        %v439 = vld [vmem:[#allocation7 + $0x20] sm:$0xf]
        %v440 = vld [vmem:[#allocation7 + $0x24] sm:$0xf]
        %v441 = vld [vmem:[#allocation7 + $0x28] sm:$0xf]
        %v442 = vld [vmem:[#allocation7 + $0x2c] sm:$0xf]
        %v443 = vld [vmem:[#allocation7 + $0x30] sm:$0xf]
        %v444 = vld [vmem:[#allocation7 + $0x34] sm:$0xf]
        %v445 = vld [vmem:[#allocation7 + $0x38] sm:$0xf]
        %v446 = vld [vmem:[#allocation7 + $0x3c] sm:$0xf]
        %v447 = vld [vmem:[%s4] sm:$0x1]
        %v449 = vperm.slane %v447, 0
        %v467 = vunpack.c.l.b16 %v431
        %v468 = vunpack.c.l.b16 %v432
        %v469 = vunpack.c.l.b16 %v433
        %v470 = vunpack.c.l.b16 %v434
        %v471 = vunpack.c.l.b16 %v435
        %v472 = vunpack.c.l.b16 %v436
        %v473 = vunpack.c.l.b16 %v437
        %v474 = vunpack.c.l.b16 %v438
        %v475 = vunpack.c.l.b16 %v439
        %v476 = vunpack.c.l.b16 %v440
        %v477 = vunpack.c.l.b16 %v441
        %v478 = vunpack.c.l.b16 %v442
        %v479 = vunpack.c.l.b16 %v443
        %v480 = vunpack.c.l.b16 %v444
        %v481 = vunpack.c.l.b16 %v445
        %v482 = vunpack.c.l.b16 %v446
        %v483 = vpack.c.b16 %v468, %v467
        %v484 = vpack.c.b16 %v470, %v469
        %v485 = vpack.c.b16 %v472, %v471
        %v486 = vpack.c.b16 %v474, %v473
        %v487 = vpack.c.b16 %v476, %v475
        %v488 = vpack.c.b16 %v478, %v477
        %v489 = vpack.c.b16 %v480, %v479
        %v490 = vpack.c.b16 %v482, %v481
        %499 = vmatpush.bf16.msra.mxu0 %v490
        %500 = vmatpush.bf16.msra.mxu0 %v489
        %501 = vmatpush.bf16.msra.mxu0 %v488
        %502 = vmatpush.bf16.msra.mxu0 %v487
        %503 = vmatpush.bf16.msra.mxu0 %v486
        %504 = vmatpush.bf16.msra.mxu0 %v485
        %505 = vmatpush.bf16.msra.mxu0 %v484
        %506 = vmatpush.bf16.msra.mxu0 %v483
        %507 = vmatmul.bf16.gmra.mxu0 %v430
        %v508 = vpop.f32.mrf.mxu0
        %v509 = vadd.f32 %v449, %v508
        %v510 = vpop.f32.mrf.mxu0
        %511 = vdwg.mxu0
        %v512 = vmax.f32 %v509, 0.0
        %v513 = vpack.c.bf16 %v512, %v512
        %v514 = vld [vmem:[#allocation8] sm:$0xf]
        %v515 = vld [vmem:[#allocation8 + $0x4] sm:$0xf]
        %v516 = vld [vmem:[#allocation8 + $0x8] sm:$0xf]
        %v517 = vld [vmem:[#allocation8 + $0xc] sm:$0xf]
        %v518 = vld [vmem:[#allocation8 + $0x10] sm:$0xf]
        %v519 = vld [vmem:[#allocation8 + $0x14] sm:$0xf]
        %v520 = vld [vmem:[#allocation8 + $0x18] sm:$0xf]
        %v521 = vld [vmem:[#allocation8 + $0x1c] sm:$0xf]
        %v522 = vld [vmem:[#allocation8 + $0x20] sm:$0xf]
        %v523 = vld [vmem:[#allocation8 + $0x24] sm:$0xf]
        %v524 = vld [vmem:[#allocation8 + $0x28] sm:$0xf]
        %v525 = vld [vmem:[#allocation8 + $0x2c] sm:$0xf]
        %v526 = vld [vmem:[#allocation8 + $0x30] sm:$0xf]
        %v527 = vld [vmem:[#allocation8 + $0x34] sm:$0xf]
        %v528 = vld [vmem:[#allocation8 + $0x38] sm:$0xf]
        %v529 = vld [vmem:[#allocation8 + $0x3c] sm:$0xf]
        %v530 = vld [vmem:[%s6] sm:$0x1]
        %v532 = vperm.slane %v530, 0
        %v550 = vunpack.c.l.b16 %v514
        %v551 = vunpack.c.l.b16 %v515
        %v552 = vunpack.c.l.b16 %v516
        %v553 = vunpack.c.l.b16 %v517
        %v554 = vunpack.c.l.b16 %v518
        %v555 = vunpack.c.l.b16 %v519
        %v556 = vunpack.c.l.b16 %v520
        %v557 = vunpack.c.l.b16 %v521
        %v558 = vunpack.c.l.b16 %v522
        %v559 = vunpack.c.l.b16 %v523
        %v560 = vunpack.c.l.b16 %v524
        %v561 = vunpack.c.l.b16 %v525
        %v562 = vunpack.c.l.b16 %v526
        %v563 = vunpack.c.l.b16 %v527
        %v564 = vunpack.c.l.b16 %v528
        %v565 = vunpack.c.l.b16 %v529
        %v566 = vpack.c.b16 %v551, %v550
        %v567 = vpack.c.b16 %v553, %v552
        %v568 = vpack.c.b16 %v555, %v554
        %v569 = vpack.c.b16 %v557, %v556
        %v570 = vpack.c.b16 %v559, %v558
        %v571 = vpack.c.b16 %v561, %v560
        %v572 = vpack.c.b16 %v563, %v562
        %v573 = vpack.c.b16 %v565, %v564
        %582 = vmatpush.bf16.msra.mxu0 %v573
        %583 = vmatpush.bf16.msra.mxu0 %v572
        %584 = vmatpush.bf16.msra.mxu0 %v571
        %585 = vmatpush.bf16.msra.mxu0 %v570
        %586 = vmatpush.bf16.msra.mxu0 %v569
        %587 = vmatpush.bf16.msra.mxu0 %v568
        %588 = vmatpush.bf16.msra.mxu0 %v567
        %589 = vmatpush.bf16.msra.mxu0 %v566
        %590 = vmatmul.bf16.gmra.mxu0 %v513
        %v591 = vpop.f32.mrf.mxu0
        %v592 = vadd.f32 %v532, %v591
        %v593 = vpop.f32.mrf.mxu0
        %594 = vdwg.mxu0
        %595 = vst [vmem:[%s345] sm:$0xff] %v592
        %s596 = sand.u32 %s186, 1
        %s597 = scalar_lea.sflag [#allocation4], %s596
        %s598 = sand.u32 %s186, 1
        %s599 = smul.addr %s598, 8
        %s600 = scalar_lea.vmem [#allocation10], %s599
        // Predicated region
        $region65: #{tpu_custom_call.1} parent=47 // pred_check
          %p601 = pneg %p196
        $region66: #{tpu_custom_call.1} parent=47 // pred_check_branch
          %603 = sbr.rel (%p601) target = $region68
        $region67: #{tpu_custom_call.1} parent=47 // pred_region
          %605 = vsyncadd %s597, 0
          %s606 = smul.addr %s26, 8
          %s607 = scalar_lea.hbm %s7, %s606
          %s609 = sshll.u32 %s600, 4
          %s610 = int_to_ptr.vmem [resolvable:$true] %s609
          %s611 = sshll.u32 %s607, 4
          %s612 = int_to_ptr.hbm [resolvable:$true] %s611
          %614 = dma.vmem_to_hbm [thread:$0]  %s610, 128, %s612, %s597
        $region68: #{tpu_custom_call.1} parent=47 // pred_fallthru
          _
      $region48: #{tpu_custom_call.1} parent=5 // pred_fallthru
        _
      %p615 = scmp.le.s32.totalorder 2, %s21
      // Predicated region
      $region69: #{tpu_custom_call.1} parent=5 // pred_check
        %p616 = pneg %p615
      $region70: #{tpu_custom_call.1} parent=5 // pred_check_branch
        %618 = sbr.rel (%p616) target = $region72
      $region71: #{tpu_custom_call.1} parent=5 // pred_region
        %s619 = ssub.s32 %s21, 2
        // Predicated region
        $region73: #{tpu_custom_call.1} parent=71 // pred_check
          %p620 = pneg %p202
        $region74: #{tpu_custom_call.1} parent=71 // pred_check_branch
          %622 = sbr.rel (%p620) target = $region76
        $region75: #{tpu_custom_call.1} parent=71 // pred_region
          %s623 = sand.u32 %s187, 1
          %s624 = scalar_lea.sflag [#allocation4], %s623
          %s625 = sand.u32 %s187, 1
          %s626 = smul.addr %s625, 8
          %s627 = scalar_lea.vmem [#allocation10], %s626
          %629 = dma.done %s624, 128
        $region76: #{tpu_custom_call.1} parent=71 // pred_fallthru
          _
      $region72: #{tpu_custom_call.1} parent=5 // pred_fallthru
        _
    $region6: #{tpu_custom_call.1} parent=1 // loop_footer
      %s25 = sadd.s32 1, %s21
    $region7: #{tpu_custom_call.1} parent=1 // loop_footer_branch
      %20 = sbr.rel target = $region3
    $region8: #{tpu_custom_call.1} parent=1 // loop_exit
      _
    %630 = vsyncpa [#allocation3], 1
    %s631 = scalar_lea.sflag [#allocation3], 1
    %632 = vsyncpa %s631, 1
    %633 = vsyncpa [#allocation6], 1
    %634 = vsyncpa [#allocation9], 1
    %635 = vsyncpa [#allocation4], 1
    %s636 = scalar_lea.sflag [#allocation4], 1
    %637 = vsyncpa %s636, 1

</llo_original>
